<compile_context>
chip_gen: v5e
topology: v5e:2x2
jax: 0.10.0
libtpu: 0.0.40
codegen_flags: <defaults>
</compile_context>

<pallas_src>
import functools

import jax
import jax.numpy as jnp
from jax.experimental import pallas as pl
from jax.experimental.pallas import tpu as pltpu

_HALF_LOG_2PI = 0.9189385332046727  # 0.5 * log(2*pi)


def _lgamma_stirling(z):
    """lgamma(z) for z > 0 via shift-by-4 + 2-term Stirling series.

    ~17 VALU mul/adds + 2 EUP logs + 1 EUP approx-reciprocal per call.
    Absolute error ~1e-6 for all z > 0 (series truncation at u >= 4 plus the
    approx-reciprocal error on the small 1/(12u) correction term).
    """
    z1 = z + 1.0
    z2 = z + 2.0
    z3 = z + 3.0
    p = z * z1 * z2 * z3                      # Gamma(z+4)/Gamma(z) shift product
    u = z + 4.0
    lu = jnp.log(u)
    r = pl.reciprocal(u, approx=True)         # EUP; only feeds the tiny series
    r2 = r * r
    series = r * (0.08333333333333333 - 0.002777777777777778 * r2)
    return (u - 0.5) * lu - u + (_HALF_LOG_2PI + series) - jnp.log(p)


# ----------------------------------------------------------------------------
# Pallas kernel
# ----------------------------------------------------------------------------
def _zinb_kernel(x_ref, mean_ref, disp_ref, pi_ref, sf_ref, out_ref,
                 *, ridge_lambda, block_g):
    j = pl.program_id(1)

    @pl.when(j == 0)
    def _():
        out_ref[...] = jnp.zeros_like(out_ref)

    eps = 1e-10
    x = x_ref[...].astype(jnp.float32)
    disp = disp_ref[...].astype(jnp.float32)
    disp_eps = disp + eps

    # t1 = lgamma(disp+eps) + lgamma(x+1) - lgamma(x+disp+eps)
    # Fold the three lgamma evaluations sequentially so their temporaries die
    # early (keeps vreg/spill pressure low at large gene tiles).
    t1 = _lgamma_stirling(disp_eps)
    t1 = t1 + _lgamma_stirling(x + 1.0)
    t1 = t1 - _lgamma_stirling(x + disp_eps)

    mean = mean_ref[...].astype(jnp.float32) * sf_ref[...].astype(jnp.float32)
    pi = pi_ref[...].astype(jnp.float32)

    ld = jnp.log(disp_eps)                    # log(disp + eps)
    lm = jnp.log(mean + eps)                  # log(mean + eps)
    ldm = jnp.log(disp + mean + eps)          # log(disp + mean + eps)
    d = ldm - ld                              # = log(1 + mean/(disp+eps)), shared

    t2 = (disp + x) * d + x * (ld - lm)
    one_m_pi = 1.0 - pi
    nb_case = t1 + t2 - jnp.log(one_m_pi + eps)

    zero_nb = jnp.exp(-(disp * d))            # (disp/(disp+mean+eps))**disp
    zero_case = -jnp.log(pi + one_m_pi * zero_nb + eps)

    result = jnp.where(x <= 1e-8, zero_case, nb_case)
    if ridge_lambda > 0:
        result = result + ridge_lambda * (pi * pi)

    # Fold the (block_b, block_g) tile into a lane-dense (block_b, 128)
    # partial sum (128-lane-aligned chunk adds, pure VALU), then accumulate
    # into the output block, which stays resident across the gene axis.
    partial = result[:, 0:128]
    for c in range(1, block_g // 128):
        partial = partial + result[:, c * 128:(c + 1) * 128]
    out_ref[...] += partial


# ----------------------------------------------------------------------------
# Wrapper
# ----------------------------------------------------------------------------
def _round_up(v, m):
    return (v + m - 1) // m * m


def zinb_loss(x, mean, disp, pi, scale_factor=None, ridge_lambda=0.0,
              max_block_b=128, max_block_g=2048):
    def as_f(a):
        a = jnp.asarray(a)
        return a if jnp.issubdtype(a.dtype, jnp.floating) else a.astype(jnp.float32)

    x, mean, disp, pi = as_f(x), as_f(mean), as_f(disp), as_f(pi)
    B, G = x.shape

    if scale_factor is None:
        sf = jnp.ones((B, 1), jnp.float32)
    else:
        sf = as_f(scale_factor).reshape(B, 1)

    # Batch tile: multiple of 8 (sublanes).  When B > 8, cap the tile at
    # round_up(ceil(B/2), 8) so there are always >= 2 batch programs and the
    # "parallel" batch axis spans both TensorCores on v7x.
    if B <= 8:
        block_b = 8
    else:
        block_b = min(max_block_b, _round_up((B + 1) // 2, 8))
    # Gene tile: multiple of 128 (lanes); <= 2048 keeps the double-buffered
    # input footprint (~8 MiB) + intermediates well inside v7x's 64 MiB VMEM.
    block_g = min(_round_up(G, 128), max_block_g)
    B_pad = _round_up(B, block_b)
    G_pad = _round_up(G, block_g)

    def pad2(a, val):
        if (B_pad, G_pad) == (B, G):
            return a
        return jnp.pad(a, ((0, B_pad - B), (0, G_pad - G)), constant_values=val)

    # Neutral padding: x=0, mean=0, pi=0, disp=1 -> per-element contribution
    # is -log(1 + eps) ~ -1e-10 (negligible); padded batch rows are sliced off.
    xp = pad2(x, 0.0)
    mp = pad2(mean, 0.0)
    dp = pad2(disp, 1.0)
    pp = pad2(pi, 0.0)
    sfp = sf if B_pad == B else jnp.pad(sf, ((0, B_pad - B), (0, 0)),
                                        constant_values=1.0)

    kernel = functools.partial(_zinb_kernel,
                               ridge_lambda=float(ridge_lambda),
                               block_g=block_g)

    tile_spec = pl.BlockSpec((block_b, block_g), lambda i, j: (i, j))
    partials = pl.pallas_call(
        kernel,
        out_shape=jax.ShapeDtypeStruct((B_pad, 128), jnp.float32),
        grid_spec=pltpu.PrefetchScalarGridSpec(
            num_scalar_prefetch=0,
            grid=(B_pad // block_b, G_pad // block_g),
            in_specs=[
                tile_spec,                                        # x
                tile_spec,                                        # mean
                tile_spec,                                        # disp
                tile_spec,                                        # pi
                pl.BlockSpec((block_b, 1), lambda i, j: (i, 0)),  # scale_factor
            ],
            out_specs=pl.BlockSpec((block_b, 128), lambda i, j: (i, 0)),
        ),
        compiler_params=pltpu.CompilerParams(
            dimension_semantics=("parallel", "arbitrary"),
            vmem_limit_bytes=32 * 1024 * 1024),
    )(xp, mp, dp, pp, sfp)

    # mean over batch of the per-row sums (padded rows excluded).
    return jnp.sum(partials[:B]) / B


# ----------------------------------------------------------------------------
# Pure-JAX reference (matches the PyTorch module semantics)
# ----------------------------------------------------------------------------
def zinb_loss_ref(x, mean, disp, pi, scale_factor=None, ridge_lambda=0.0):
    eps = 1e-10
    if scale_factor is not None:
        mean = mean * scale_factor[:, None]
    lg = jax.scipy.special.gammaln
    t1 = lg(disp + eps) + lg(x + 1.0) - lg(x + disp + eps)
    t2 = ((disp + x) * jnp.log(1.0 + mean / (disp + eps))
          + x * (jnp.log(disp + eps) - jnp.log(mean + eps)))
    nb_final = t1 + t2
    nb_case = nb_final - jnp.log(1.0 - pi + eps)
    zero_nb = jnp.power(disp / (disp + mean + eps), disp)
    zero_case = -jnp.log(pi + (1.0 - pi) * zero_nb + eps)
    result = jnp.where(x <= 1e-8, zero_case, nb_case)
    if ridge_lambda > 0:
        result = result + ridge_lambda * jnp.square(pi)
    return jnp.mean(jnp.sum(result, axis=1))


if __name__ == "__main__":
    B, G = 16, 256
    key = jax.random.PRNGKey(0)
    k1, k2, k3, k4, k5 = jax.random.split(key, 5)

    # ZINBLoss has no parameters; only runtime inputs (counts / NB params).
    x = jax.random.poisson(k1, 3.0, (B, G)).astype(jnp.float32)        # counts
    mean = jnp.exp(0.5 * jax.random.normal(k2, (B, G)))                # >0
    disp = jnp.exp(0.5 * jax.random.normal(k3, (B, G)))                # >0
    pi = jax.nn.sigmoid(jax.random.normal(k4, (B, G)))                 # (0,1)
    scale_factor = jnp.exp(0.1 * jax.random.normal(k5, (B,)))          # >0

    loss = zinb_loss(x, mean, disp, pi, scale_factor=scale_factor,
                     ridge_lambda=0.1)
    loss = jax.block_until_ready(loss)

    ref = zinb_loss_ref(x, mean, disp, pi, scale_factor=scale_factor,
                        ridge_lambda=0.1)
    ref = jax.block_until_ready(ref)

    assert jnp.isfinite(loss), "kernel produced non-finite loss"
    assert jnp.allclose(loss, ref, rtol=1e-3, atol=1e-2), (loss, ref)
    print("KERNEL_OK")
</pallas_src>

<mosaic_0001>
module attributes {stable_mosaic.version = 11 : i64} {
  func.func @_zinb_kernel(%arg0: i32, %arg1: i32, %arg2: memref<8x256xf32, #tpu.memory_space<vmem>>, %arg3: memref<8x256xf32, #tpu.memory_space<vmem>>, %arg4: memref<8x256xf32, #tpu.memory_space<vmem>>, %arg5: memref<8x256xf32, #tpu.memory_space<vmem>>, %arg6: memref<8x1xf32, #tpu.memory_space<vmem>>, %arg7: memref<8x128xf32, #tpu.memory_space<vmem>>) attributes {dimension_semantics = [#tpu.dimension_semantics<parallel>, #tpu.dimension_semantics<arbitrary>], iteration_bounds = array<i64: 2, 1>, scalar_prefetch = 0 : i64, scratch_operands = 0 : i64, tpu.core_type = #tpu.core_type<tc>, window_params = [{transform_indices = @transform_0, window_bounds = array<i64: 8, 256>}, {transform_indices = @transform_1, window_bounds = array<i64: 8, 256>}, {transform_indices = @transform_2, window_bounds = array<i64: 8, 256>}, {transform_indices = @transform_3, window_bounds = array<i64: 8, 256>}, {transform_indices = @transform_4, window_bounds = array<i64: 8, 1>}, {transform_indices = @transform_5, window_bounds = array<i64: 8, 128>}]} {
    %c0_i32 = arith.constant 0 : i32
    %0 = arith.cmpi eq, %arg1, %c0_i32 : i32
    %1 = arith.extui %0 : i1 to i32
    %c0_i32_0 = arith.constant 0 : i32
    %2 = arith.cmpi ne, %1, %c0_i32_0 : i32
    scf.if %2 {
      %cst_48 = arith.constant 0.000000e+00 : f32
      %146 = vector.broadcast %cst_48 : f32 to vector<8x128xf32>
      %c0_49 = arith.constant 0 : index
      %c0_50 = arith.constant 0 : index
      %147 = vector.load %arg7[%c0_49, %c0_50] : memref<8x128xf32, #tpu.memory_space<vmem>>, vector<8x128xf32>
      tpu.vector_store %arg7[%c0_49, %c0_50], %146 {strides = array<i32>} : memref<8x128xf32, #tpu.memory_space<vmem>>, vector<8x128xf32>,
    } else {
    }
    %c0 = arith.constant 0 : index
    %c0_1 = arith.constant 0 : index
    %3 = vector.load %arg2[%c0, %c0_1] : memref<8x256xf32, #tpu.memory_space<vmem>>, vector<8x256xf32>
    %c0_2 = arith.constant 0 : index
    %c0_3 = arith.constant 0 : index
    %4 = vector.load %arg4[%c0_2, %c0_3] : memref<8x256xf32, #tpu.memory_space<vmem>>, vector<8x256xf32>
    %cst = arith.constant 1.000000e-10 : f32
    %5 = vector.broadcast %cst : f32 to vector<8x256xf32>
    %6 = arith.addf %4, %5 : vector<8x256xf32>
    %cst_4 = arith.constant 1.000000e+00 : f32
    %7 = vector.broadcast %cst_4 : f32 to vector<8x256xf32>
    %8 = arith.addf %6, %7 : vector<8x256xf32>
    %cst_5 = arith.constant 2.000000e+00 : f32
    %9 = vector.broadcast %cst_5 : f32 to vector<8x256xf32>
    %10 = arith.addf %6, %9 : vector<8x256xf32>
    %cst_6 = arith.constant 3.000000e+00 : f32
    %11 = vector.broadcast %cst_6 : f32 to vector<8x256xf32>
    %12 = arith.addf %6, %11 : vector<8x256xf32>
    %13 = arith.mulf %6, %8 : vector<8x256xf32>
    %14 = arith.mulf %13, %10 : vector<8x256xf32>
    %15 = arith.mulf %14, %12 : vector<8x256xf32>
    %cst_7 = arith.constant 4.000000e+00 : f32
    %16 = vector.broadcast %cst_7 : f32 to vector<8x256xf32>
    %17 = arith.addf %6, %16 : vector<8x256xf32>
    %18 = math.log %17 : vector<8x256xf32>
    %19 = tpu.reciprocal %17 {approx = true} : vector<8x256xf32> -> vector<8x256xf32>
    %20 = arith.mulf %19, %19 : vector<8x256xf32>
    %cst_8 = arith.constant 0.00277777785 : f32
    %21 = vector.broadcast %cst_8 : f32 to vector<8x256xf32>
    %22 = arith.mulf %21, %20 : vector<8x256xf32>
    %cst_9 = arith.constant 0.0833333358 : f32
    %23 = vector.broadcast %cst_9 : f32 to vector<8x256xf32>
    %24 = arith.subf %23, %22 : vector<8x256xf32>
    %25 = arith.mulf %19, %24 : vector<8x256xf32>
    %cst_10 = arith.constant 5.000000e-01 : f32
    %26 = vector.broadcast %cst_10 : f32 to vector<8x256xf32>
    %27 = arith.subf %17, %26 : vector<8x256xf32>
    %28 = arith.mulf %27, %18 : vector<8x256xf32>
    %29 = arith.subf %28, %17 : vector<8x256xf32>
    %cst_11 = arith.constant 0.918938517 : f32
    %30 = vector.broadcast %cst_11 : f32 to vector<8x256xf32>
    %31 = arith.addf %30, %25 : vector<8x256xf32>
    %32 = arith.addf %29, %31 : vector<8x256xf32>
    %33 = math.log %15 : vector<8x256xf32>
    %34 = arith.subf %32, %33 : vector<8x256xf32>
    %cst_12 = arith.constant 1.000000e+00 : f32
    %35 = vector.broadcast %cst_12 : f32 to vector<8x256xf32>
    %36 = arith.addf %3, %35 : vector<8x256xf32>
    %cst_13 = arith.constant 1.000000e+00 : f32
    %37 = vector.broadcast %cst_13 : f32 to vector<8x256xf32>
    %38 = arith.addf %36, %37 : vector<8x256xf32>
    %cst_14 = arith.constant 2.000000e+00 : f32
    %39 = vector.broadcast %cst_14 : f32 to vector<8x256xf32>
    %40 = arith.addf %36, %39 : vector<8x256xf32>
    %cst_15 = arith.constant 3.000000e+00 : f32
    %41 = vector.broadcast %cst_15 : f32 to vector<8x256xf32>
    %42 = arith.addf %36, %41 : vector<8x256xf32>
    %43 = arith.mulf %36, %38 : vector<8x256xf32>
    %44 = arith.mulf %43, %40 : vector<8x256xf32>
    %45 = arith.mulf %44, %42 : vector<8x256xf32>
    %cst_16 = arith.constant 4.000000e+00 : f32
    %46 = vector.broadcast %cst_16 : f32 to vector<8x256xf32>
    %47 = arith.addf %36, %46 : vector<8x256xf32>
    %48 = math.log %47 : vector<8x256xf32>
    %49 = tpu.reciprocal %47 {approx = true} : vector<8x256xf32> -> vector<8x256xf32>
    %50 = arith.mulf %49, %49 : vector<8x256xf32>
    %cst_17 = arith.constant 0.00277777785 : f32
    %51 = vector.broadcast %cst_17 : f32 to vector<8x256xf32>
    %52 = arith.mulf %51, %50 : vector<8x256xf32>
    %cst_18 = arith.constant 0.0833333358 : f32
    %53 = vector.broadcast %cst_18 : f32 to vector<8x256xf32>
    %54 = arith.subf %53, %52 : vector<8x256xf32>
    %55 = arith.mulf %49, %54 : vector<8x256xf32>
    %cst_19 = arith.constant 5.000000e-01 : f32
    %56 = vector.broadcast %cst_19 : f32 to vector<8x256xf32>
    %57 = arith.subf %47, %56 : vector<8x256xf32>
    %58 = arith.mulf %57, %48 : vector<8x256xf32>
    %59 = arith.subf %58, %47 : vector<8x256xf32>
    %cst_20 = arith.constant 0.918938517 : f32
    %60 = vector.broadcast %cst_20 : f32 to vector<8x256xf32>
    %61 = arith.addf %60, %55 : vector<8x256xf32>
    %62 = arith.addf %59, %61 : vector<8x256xf32>
    %63 = math.log %45 : vector<8x256xf32>
    %64 = arith.subf %62, %63 : vector<8x256xf32>
    %65 = arith.addf %34, %64 : vector<8x256xf32>
    %66 = arith.addf %3, %6 : vector<8x256xf32>
    %cst_21 = arith.constant 1.000000e+00 : f32
    %67 = vector.broadcast %cst_21 : f32 to vector<8x256xf32>
    %68 = arith.addf %66, %67 : vector<8x256xf32>
    %cst_22 = arith.constant 2.000000e+00 : f32
    %69 = vector.broadcast %cst_22 : f32 to vector<8x256xf32>
    %70 = arith.addf %66, %69 : vector<8x256xf32>
    %cst_23 = arith.constant 3.000000e+00 : f32
    %71 = vector.broadcast %cst_23 : f32 to vector<8x256xf32>
    %72 = arith.addf %66, %71 : vector<8x256xf32>
    %73 = arith.mulf %66, %68 : vector<8x256xf32>
    %74 = arith.mulf %73, %70 : vector<8x256xf32>
    %75 = arith.mulf %74, %72 : vector<8x256xf32>
    %cst_24 = arith.constant 4.000000e+00 : f32
    %76 = vector.broadcast %cst_24 : f32 to vector<8x256xf32>
    %77 = arith.addf %66, %76 : vector<8x256xf32>
    %78 = math.log %77 : vector<8x256xf32>
    %79 = tpu.reciprocal %77 {approx = true} : vector<8x256xf32> -> vector<8x256xf32>
    %80 = arith.mulf %79, %79 : vector<8x256xf32>
    %cst_25 = arith.constant 0.00277777785 : f32
    %81 = vector.broadcast %cst_25 : f32 to vector<8x256xf32>
    %82 = arith.mulf %81, %80 : vector<8x256xf32>
    %cst_26 = arith.constant 0.0833333358 : f32
    %83 = vector.broadcast %cst_26 : f32 to vector<8x256xf32>
    %84 = arith.subf %83, %82 : vector<8x256xf32>
    %85 = arith.mulf %79, %84 : vector<8x256xf32>
    %cst_27 = arith.constant 5.000000e-01 : f32
    %86 = vector.broadcast %cst_27 : f32 to vector<8x256xf32>
    %87 = arith.subf %77, %86 : vector<8x256xf32>
    %88 = arith.mulf %87, %78 : vector<8x256xf32>
    %89 = arith.subf %88, %77 : vector<8x256xf32>
    %cst_28 = arith.constant 0.918938517 : f32
    %90 = vector.broadcast %cst_28 : f32 to vector<8x256xf32>
    %91 = arith.addf %90, %85 : vector<8x256xf32>
    %92 = arith.addf %89, %91 : vector<8x256xf32>
    %93 = math.log %75 : vector<8x256xf32>
    %94 = arith.subf %92, %93 : vector<8x256xf32>
    %95 = arith.subf %65, %94 : vector<8x256xf32>
    %c0_29 = arith.constant 0 : index
    %c0_30 = arith.constant 0 : index
    %96 = vector.load %arg3[%c0_29, %c0_30] : memref<8x256xf32, #tpu.memory_space<vmem>>, vector<8x256xf32>
    %c0_31 = arith.constant 0 : index
    %c0_32 = arith.constant 0 : index
    %97 = vector.load %arg6[%c0_31, %c0_32] : memref<8x1xf32, #tpu.memory_space<vmem>>, vector<8x1xf32>
    %98 = vector.broadcast %97 : vector<8x1xf32> to vector<8x256xf32>
    %99 = arith.mulf %96, %98 : vector<8x256xf32>
    %c0_33 = arith.constant 0 : index
    %c0_34 = arith.constant 0 : index
    %100 = vector.load %arg5[%c0_33, %c0_34] : memref<8x256xf32, #tpu.memory_space<vmem>>, vector<8x256xf32>
    %101 = math.log %6 : vector<8x256xf32>
    %cst_35 = arith.constant 1.000000e-10 : f32
    %102 = vector.broadcast %cst_35 : f32 to vector<8x256xf32>
    %103 = arith.addf %99, %102 : vector<8x256xf32>
    %104 = math.log %103 : vector<8x256xf32>
    %105 = arith.addf %4, %99 : vector<8x256xf32>
    %cst_36 = arith.constant 1.000000e-10 : f32
    %106 = vector.broadcast %cst_36 : f32 to vector<8x256xf32>
    %107 = arith.addf %105, %106 : vector<8x256xf32>
    %108 = math.log %107 : vector<8x256xf32>
    %109 = arith.subf %108, %101 : vector<8x256xf32>
    %110 = arith.addf %4, %3 : vector<8x256xf32>
    %111 = arith.mulf %110, %109 : vector<8x256xf32>
    %112 = arith.subf %101, %104 : vector<8x256xf32>
    %113 = arith.mulf %3, %112 : vector<8x256xf32>
    %114 = arith.addf %111, %113 : vector<8x256xf32>
    %cst_37 = arith.constant 1.000000e+00 : f32
    %115 = vector.broadcast %cst_37 : f32 to vector<8x256xf32>
    %116 = arith.subf %115, %100 : vector<8x256xf32>
    %117 = arith.addf %95, %114 : vector<8x256xf32>
    %cst_38 = arith.constant 1.000000e-10 : f32
    %118 = vector.broadcast %cst_38 : f32 to vector<8x256xf32>
    %119 = arith.addf %116, %118 : vector<8x256xf32>
    %120 = math.log %119 : vector<8x256xf32>
    %121 = arith.subf %117, %120 : vector<8x256xf32>
    %122 = arith.mulf %4, %109 : vector<8x256xf32>
    %cst_39 = arith.constant 0.000000e+00 : f32
    %123 = vector.broadcast %cst_39 : f32 to vector<8x256xf32>
    %124 = arith.subf %123, %122 : vector<8x256xf32>
    %125 = math.exp %124 : vector<8x256xf32>
    %126 = arith.mulf %116, %125 : vector<8x256xf32>
    %127 = arith.addf %100, %126 : vector<8x256xf32>
    %cst_40 = arith.constant 1.000000e-10 : f32
    %128 = vector.broadcast %cst_40 : f32 to vector<8x256xf32>
    %129 = arith.addf %127, %128 : vector<8x256xf32>
    %130 = math.log %129 : vector<8x256xf32>
    %cst_41 = arith.constant 0.000000e+00 : f32
    %131 = vector.broadcast %cst_41 : f32 to vector<8x256xf32>
    %132 = arith.subf %131, %130 : vector<8x256xf32>
    %cst_42 = arith.constant 9.99999993E-9 : f32
    %133 = vector.broadcast %cst_42 : f32 to vector<8x256xf32>
    %134 = arith.cmpf ole, %3, %133 : vector<8x256xf32>
    %135 = arith.select %134, %132, %121 : vector<8x256xi1>, vector<8x256xf32>
    %136 = arith.mulf %100, %100 : vector<8x256xf32>
    %cst_43 = arith.constant 1.000000e-01 : f32
    %137 = vector.broadcast %cst_43 : f32 to vector<8x256xf32>
    %138 = arith.mulf %137, %136 : vector<8x256xf32>
    %139 = arith.addf %135, %138 : vector<8x256xf32>
    %140 = vector.extract_strided_slice %139 {offsets = [0, 0], sizes = [8, 128], strides = [1, 1]} : vector<8x256xf32> to vector<8x128xf32>
    %141 = vector.extract_strided_slice %139 {offsets = [0, 128], sizes = [8, 128], strides = [1, 1]} : vector<8x256xf32> to vector<8x128xf32>
    %142 = arith.addf %140, %141 : vector<8x128xf32>
    %c0_44 = arith.constant 0 : index
    %c0_45 = arith.constant 0 : index
    %143 = vector.load %arg7[%c0_44, %c0_45] : memref<8x128xf32, #tpu.memory_space<vmem>>, vector<8x128xf32>
    %144 = arith.addf %143, %142 : vector<8x128xf32>
    %c0_46 = arith.constant 0 : index
    %c0_47 = arith.constant 0 : index
    %145 = vector.load %arg7[%c0_46, %c0_47] : memref<8x128xf32, #tpu.memory_space<vmem>>, vector<8x128xf32>
    tpu.vector_store %arg7[%c0_46, %c0_47], %144 {strides = array<i32>} : memref<8x128xf32, #tpu.memory_space<vmem>>, vector<8x128xf32>,
    return
  }
  func.func @transform_0(%arg0: i32, %arg1: i32) -> (i32, i32) {
    %c0_i32 = arith.constant 0 : i32
    return %arg0, %arg1 : i32, i32
  }
  func.func @transform_1(%arg0: i32, %arg1: i32) -> (i32, i32) {
    %c0_i32 = arith.constant 0 : i32
    return %arg0, %arg1 : i32, i32
  }
  func.func @transform_2(%arg0: i32, %arg1: i32) -> (i32, i32) {
    %c0_i32 = arith.constant 0 : i32
    return %arg0, %arg1 : i32, i32
  }
  func.func @transform_3(%arg0: i32, %arg1: i32) -> (i32, i32) {
    %c0_i32 = arith.constant 0 : i32
    return %arg0, %arg1 : i32, i32
  }
  func.func @transform_4(%arg0: i32, %arg1: i32) -> (i32, i32) {
    %c0_i32 = arith.constant 0 : i32
    %c0_i32_0 = arith.constant 0 : i32
    return %arg0, %c0_i32 : i32, i32
  }
  func.func @transform_5(%arg0: i32, %arg1: i32) -> (i32, i32) {
    %c0_i32 = arith.constant 0 : i32
    %c0_i32_0 = arith.constant 0 : i32
    return %arg0, %c0_i32 : i32, i32
  }
}

</mosaic_0001>

<llo_original>
// kernel: tpu_custom_call.1
$region0: #{tpu_custom_call.1}
  #allocation0 [shape = 'u32[]', space=smem, size = 0x4, offset = 0x4, fixed_abs, tag = 'smem constant byte address 0x4 - core index']
  #allocation1 [shape = 'u32[72,128]{1,0:T(1,128)}', space=vmem, size = 0x9000, scoped, tag = 'internal scratch']
  %s0 = inlined_call_operand.hbm [shape: f32[16,256], index: 0, kind: input, shape index: {}]
  %s1 = inlined_call_operand.hbm [shape: f32[16,256], index: 1, kind: input, shape index: {}]
  %s2 = inlined_call_operand.hbm [shape: f32[16,256], index: 2, kind: input, shape index: {}]
  %s3 = inlined_call_operand.hbm [shape: f32[16,256], index: 3, kind: input, shape index: {}]
  %s4 = inlined_call_operand.vmem [shape: f32[16,1], index: 4, kind: input, shape index: {}]
  %s5 = inlined_call_operand.hbm [shape: f32[16,128], index: 5, kind: output, shape index: {}]
  %s6 = sld [smem:[#allocation0]]
  $region73: #{tpu_custom_call.1} parent=0
    _
  %s8 = ssub.s32 1, %s6
  %s9 = scalar_select 0, %s8, %s6
  $region1: #{tpu_custom_call.1} parent=0
    #allocation2 [shape = 'u8[16384]{0}', space=vmem, size = 0x4000, scoped, tag = 'input window, operand 0']
    #allocation3 [shape = 's32[2]{0}', space=sflag, size = 0x8, scoped, tag = 'scoped memory for tpu_custom_call.1']
    #allocation4 [shape = 's32[2]{0}', space=sflag, size = 0x8, scoped, tag = 'scoped memory for tpu_custom_call.1']
    #allocation5 [shape = 'u8[16384]{0}', space=vmem, size = 0x4000, scoped, tag = 'input window, operand 1']
    #allocation6 [shape = 's32[2]{0}', space=sflag, size = 0x8, scoped, tag = 'scoped memory for tpu_custom_call.1']
    #allocation7 [shape = 'u8[16384]{0}', space=vmem, size = 0x4000, scoped, tag = 'input window, operand 2']
    #allocation8 [shape = 'u8[16384]{0}', space=vmem, size = 0x4000, scoped, tag = 'input window, operand 3']
    #allocation9 [shape = 's32[2]{0}', space=sflag, size = 0x8, scoped, tag = 'scoped memory for tpu_custom_call.1']
    #allocation10 [shape = 'u8[8192]{0}', space=vmem, size = 0x2000, scoped, tag = 'output window, operand 0']
    %10 = vsyncpa [#allocation3], 0
    %s11 = scalar_lea.sflag [#allocation3], 1
    %12 = vsyncpa %s11, 0
    %13 = vsyncpa [#allocation6], 0
    %s14 = scalar_lea.sflag [#allocation6], 1
    %15 = vsyncpa %s14, 0
    %16 = vsyncpa [#allocation9], 0
    %s17 = scalar_lea.sflag [#allocation9], 1
    %18 = vsyncpa %s17, 0
    %19 = vsyncpa [#allocation4], 0
    %s20 = scalar_lea.sflag [#allocation4], 1
    %21 = vsyncpa %s20, 0
    loop: start=0, step=1, limit=4
    $region2: #{tpu_custom_call.1} parent=1 // loop_pre_header
      _
    $region3: #{tpu_custom_call.1} parent=1 // loop_header
      %s23 = sphi 0, %s27
      %p24 = scmp.ge.s32.totalorder %s23, 4
      %s30 = sphi 0, %s42
      %s31 = sphi 0, %s38
      %s32 = sphi 0, %s30
      %s33 = sphi 0, %s31
      %s34 = sphi 0, %s32
      %s35 = sphi 0, %s33
      %s47 = sphi 0, %s49
      %s50 = sphi 0, %s47
      %s51 = sphi 0, %s50
      %s67 = sphi 0, %s51
      %s75 = sphi 0, %s77
      %s78 = sphi 0, %s75
      %s79 = sphi 0, %s78
      %s95 = sphi 0, %s79
      %s103 = sphi 0, %s105
      %s106 = sphi 0, %s103
      %s107 = sphi 0, %s106
      %s123 = sphi 0, %s107
      %s131 = sphi 0, %s133
      %s134 = sphi 0, %s131
      %s135 = sphi 0, %s134
      %s151 = sphi 0, %s135
      %s157 = sphi 0, %s159
      %s160 = sphi 0, %s157
      %s161 = sphi 0, %s160
      %s177 = sphi 0, %s161
      %s183 = sphi 0, %s185
      %s186 = sphi 0, %s183
      %s187 = sphi 0, %s186
      %s203 = sphi 0, %s187
    $region4: #{tpu_custom_call.1} parent=1 // loop_header_branch
      %26 = sbr.rel (%p24) target = $region8
    $region5: #{tpu_custom_call.1} parent=1 // loop_body
      %s28 = ssub.s32 %s23, 1
      %s29 = ssub.s32 %s23, 2
      %s36 = sadd.s32 1, %s31
      %p37 = scmp.ge.s32.totalorder %s36, 1
      %s38 = scalar_select %p37, 0, %s36
      %s39 = sadd.s32 1, %s30
      %s40 = scalar_select %p37, %s39, %s30
      %p41 = scmp.ge.s32.totalorder %s40, 2
      %s42 = scalar_select %p41, 0, %s40
      %s43 = ssub.s32 %s30, %s42
      %s44 = ssub.s32 %s31, %s38
      %s45 = sor.u32 %s43, %s44
      %p46 = scmp.eq.s32.totalorder %s45, 0
      %s48 = sadd.s32 %s47, 1
      %s49 = scalar_select %p46, %s47, %s48
      %p52 = pneg %p46
      %p53 = scmp.eq.s32.totalorder %s23, 1
      %p54 = por %p52, %p53
      %p55 = scmp.ne.s32.totalorder %s47, %s50
      %p56 = scmp.eq.s32.totalorder %s23, 0
      %p57 = por %p55, %p56
      %p58 = scmp.ne.s32.totalorder %s47, %s50
      %p59 = scmp.eq.s32.totalorder %s28, 1
      %p60 = por %p58, %p59
      %p61 = scmp.ne.s32.totalorder %s50, %s51
      %p62 = scmp.eq.s32.totalorder %s28, 0
      %p63 = por %p61, %p62
      %p64 = scmp.ne.s32.totalorder %s50, %s51
      %p65 = scmp.eq.s32.totalorder %s29, 1
      %p66 = por %p64, %p65
      %p68 = scmp.ne.s32.totalorder %s51, %s67
      %p69 = scmp.eq.s32.totalorder %s29, 0
      %p70 = por %p68, %p69
      %s71 = ssub.s32 %s30, %s42
      %s72 = ssub.s32 %s31, %s38
      %s73 = sor.u32 %s71, %s72
      %p74 = scmp.eq.s32.totalorder %s73, 0
      %s76 = sadd.s32 %s75, 1
      %s77 = scalar_select %p74, %s75, %s76
      %p80 = pneg %p74
      %p81 = scmp.eq.s32.totalorder %s23, 1
      %p82 = por %p80, %p81
      %p83 = scmp.ne.s32.totalorder %s75, %s78
      %p84 = scmp.eq.s32.totalorder %s23, 0
      %p85 = por %p83, %p84
      %p86 = scmp.ne.s32.totalorder %s75, %s78
      %p87 = scmp.eq.s32.totalorder %s28, 1
      %p88 = por %p86, %p87
      %p89 = scmp.ne.s32.totalorder %s78, %s79
      %p90 = scmp.eq.s32.totalorder %s28, 0
      %p91 = por %p89, %p90
      %p92 = scmp.ne.s32.totalorder %s78, %s79
      %p93 = scmp.eq.s32.totalorder %s29, 1
      %p94 = por %p92, %p93
      %p96 = scmp.ne.s32.totalorder %s79, %s95
      %p97 = scmp.eq.s32.totalorder %s29, 0
      %p98 = por %p96, %p97
      %s99 = ssub.s32 %s30, %s42
      %s100 = ssub.s32 %s31, %s38
      %s101 = sor.u32 %s99, %s100
      %p102 = scmp.eq.s32.totalorder %s101, 0
      %s104 = sadd.s32 %s103, 1
      %s105 = scalar_select %p102, %s103, %s104
      %p108 = pneg %p102
      %p109 = scmp.eq.s32.totalorder %s23, 1
      %p110 = por %p108, %p109
      %p111 = scmp.ne.s32.totalorder %s103, %s106
      %p112 = scmp.eq.s32.totalorder %s23, 0
      %p113 = por %p111, %p112
      %p114 = scmp.ne.s32.totalorder %s103, %s106
      %p115 = scmp.eq.s32.totalorder %s28, 1
      %p116 = por %p114, %p115
      %p117 = scmp.ne.s32.totalorder %s106, %s107
      %p118 = scmp.eq.s32.totalorder %s28, 0
      %p119 = por %p117, %p118
      %p120 = scmp.ne.s32.totalorder %s106, %s107
      %p121 = scmp.eq.s32.totalorder %s29, 1
      %p122 = por %p120, %p121
      %p124 = scmp.ne.s32.totalorder %s107, %s123
      %p125 = scmp.eq.s32.totalorder %s29, 0
      %p126 = por %p124, %p125
      %s127 = ssub.s32 %s30, %s42
      %s128 = ssub.s32 %s31, %s38
      %s129 = sor.u32 %s127, %s128
      %p130 = scmp.eq.s32.totalorder %s129, 0
      %s132 = sadd.s32 %s131, 1
      %s133 = scalar_select %p130, %s131, %s132
      %p136 = pneg %p130
      %p137 = scmp.eq.s32.totalorder %s23, 1
      %p138 = por %p136, %p137
      %p139 = scmp.ne.s32.totalorder %s131, %s134
      %p140 = scmp.eq.s32.totalorder %s23, 0
      %p141 = por %p139, %p140
      %p142 = scmp.ne.s32.totalorder %s131, %s134
      %p143 = scmp.eq.s32.totalorder %s28, 1
      %p144 = por %p142, %p143
      %p145 = scmp.ne.s32.totalorder %s134, %s135
      %p146 = scmp.eq.s32.totalorder %s28, 0
      %p147 = por %p145, %p146
      %p148 = scmp.ne.s32.totalorder %s134, %s135
      %p149 = scmp.eq.s32.totalorder %s29, 1
      %p150 = por %p148, %p149
      %p152 = scmp.ne.s32.totalorder %s135, %s151
      %p153 = scmp.eq.s32.totalorder %s29, 0
      %p154 = por %p152, %p153
      %s155 = ssub.s32 %s30, %s42
      %p156 = scmp.eq.s32.totalorder %s155, 0
      %s158 = sadd.s32 %s157, 1
      %s159 = scalar_select %p156, %s157, %s158
      %p162 = pneg %p156
      %p163 = scmp.eq.s32.totalorder %s23, 1
      %p164 = por %p162, %p163
      %p165 = scmp.ne.s32.totalorder %s157, %s160
      %p166 = scmp.eq.s32.totalorder %s23, 0
      %p167 = por %p165, %p166
      %p168 = scmp.ne.s32.totalorder %s157, %s160
      %p169 = scmp.eq.s32.totalorder %s28, 1
      %p170 = por %p168, %p169
      %p171 = scmp.ne.s32.totalorder %s160, %s161
      %p172 = scmp.eq.s32.totalorder %s28, 0
      %p173 = por %p171, %p172
      %p174 = scmp.ne.s32.totalorder %s160, %s161
      %p175 = scmp.eq.s32.totalorder %s29, 1
      %p176 = por %p174, %p175
      %p178 = scmp.ne.s32.totalorder %s161, %s177
      %p179 = scmp.eq.s32.totalorder %s29, 0
      %p180 = por %p178, %p179
      %s181 = ssub.s32 %s30, %s42
      %p182 = scmp.eq.s32.totalorder %s181, 0
      %s184 = sadd.s32 %s183, 1
      %s185 = scalar_select %p182, %s183, %s184
      %p188 = pneg %p182
      %p189 = scmp.eq.s32.totalorder %s23, 1
      %p190 = por %p188, %p189
      %p191 = scmp.ne.s32.totalorder %s183, %s186
      %p192 = scmp.eq.s32.totalorder %s23, 0
      %p193 = por %p191, %p192
      %p194 = scmp.ne.s32.totalorder %s183, %s186
      %p195 = scmp.eq.s32.totalorder %s28, 1
      %p196 = por %p194, %p195
      %p197 = scmp.ne.s32.totalorder %s186, %s187
      %p198 = scmp.eq.s32.totalorder %s28, 0
      %p199 = por %p197, %p198
      %p200 = scmp.ne.s32.totalorder %s186, %s187
      %p201 = scmp.eq.s32.totalorder %s29, 1
      %p202 = por %p200, %p201
      %p204 = scmp.ne.s32.totalorder %s187, %s203
      %p205 = scmp.eq.s32.totalorder %s29, 0
      %p206 = por %p204, %p205
      %p207 = scmp.le.s32.totalorder 1, %s23
      %p208 = scmp.lt.s32.totalorder %s23, 3
      %p209 = pnand %p207, %p208
      %p210 = pneg %p209
      // Predicated region
      $region9: #{tpu_custom_call.1} parent=5 // pred_check
        _
      $region10: #{tpu_custom_call.1} parent=5 // pred_check_branch
        %212 = sbr.rel (%p209) target = $region12
      $region11: #{tpu_custom_call.1} parent=5 // pred_region
        %s213 = ssub.s32 %s23, 1
      $region12: #{tpu_custom_call.1} parent=5 // pred_fallthru
        _
      %p214 = scmp.lt.s32.totalorder %s23, 2
      // Predicated region
      $region13: #{tpu_custom_call.1} parent=5 // pred_check
        %p215 = pneg %p214
      $region14: #{tpu_custom_call.1} parent=5 // pred_check_branch
        %217 = sbr.rel (%p215) target = $region16
      $region15: #{tpu_custom_call.1} parent=5 // pred_region
        // Predicated region
        $region17: #{tpu_custom_call.1} parent=15 // pred_check
          %p218 = pneg %p57
        $region18: #{tpu_custom_call.1} parent=15 // pred_check_branch
          %220 = sbr.rel (%p218) target = $region20
        $region19: #{tpu_custom_call.1} parent=15 // pred_region
          %s221 = sand.u32 %s47, 1
          %s222 = scalar_lea.sflag [#allocation3], %s221
          %s223 = sand.u32 %s47, 1
          %s224 = smul.addr %s223, 16
          %s225 = scalar_lea.vmem [#allocation2], %s224
          %s226 = smul.u32 2, %s31
          %228 = vsyncadd %s222, 0
          %s229 = smul.addr %s30, 2
          %s230 = sadd.s32 %s226, %s229
          %s231 = smul.addr %s230, 8
          %s232 = scalar_lea.hbm %s0, %s231
          %s234 = sshll.u32 %s232, 4
          %s235 = int_to_ptr.hbm [resolvable:$true] %s234
          %s236 = sshll.u32 %s225, 4
          %s237 = int_to_ptr.vmem [resolvable:$true] %s236
          %239 = dma.hbm_to_vmem [thread:$0]  %s235, 256, %s237, %s222
        $region20: #{tpu_custom_call.1} parent=15 // pred_fallthru
          _
        // Predicated region
        $region21: #{tpu_custom_call.1} parent=15 // pred_check
          %p240 = pneg %p85
        $region22: #{tpu_custom_call.1} parent=15 // pred_check_branch
          %242 = sbr.rel (%p240) target = $region24
        $region23: #{tpu_custom_call.1} parent=15 // pred_region
          %s243 = sand.u32 %s23, 1
          %s244 = scalar_lea.sflag [#allocation6], %s243
          %s245 = sand.u32 %s75, 1
          %s246 = smul.addr %s245, 16
          %s247 = scalar_lea.vmem [#allocation5], %s246
          %s248 = smul.u32 2, %s31
          %250 = vsyncadd %s244, 0
          %s251 = smul.addr %s30, 2
          %s252 = sadd.s32 %s248, %s251
          %s253 = smul.addr %s252, 8
          %s254 = scalar_lea.hbm %s1, %s253
          %s256 = sshll.u32 %s254, 4
          %s257 = int_to_ptr.hbm [resolvable:$true] %s256
          %s258 = sshll.u32 %s247, 4
          %s259 = int_to_ptr.vmem [resolvable:$true] %s258
          %261 = dma.hbm_to_vmem [thread:$0]  %s257, 256, %s259, %s244
        $region24: #{tpu_custom_call.1} parent=15 // pred_fallthru
          _
        // Predicated region
        $region25: #{tpu_custom_call.1} parent=15 // pred_check
          %p262 = pneg %p113
        $region26: #{tpu_custom_call.1} parent=15 // pred_check_branch
          %264 = sbr.rel (%p262) target = $region28
        $region27: #{tpu_custom_call.1} parent=15 // pred_region
          %s265 = sand.u32 %s23, 1
          %s266 = scalar_lea.sflag [#allocation6], %s265
          %s267 = sand.u32 %s103, 1
          %s268 = smul.addr %s267, 16
          %s269 = scalar_lea.vmem [#allocation7], %s268
          %s270 = smul.u32 2, %s31
          %272 = vsyncadd %s266, 0
          %s273 = smul.addr %s30, 2
          %s274 = sadd.s32 %s270, %s273
          %s275 = smul.addr %s274, 8
          %s276 = scalar_lea.hbm %s2, %s275
          %s278 = sshll.u32 %s276, 4
          %s279 = int_to_ptr.hbm [resolvable:$true] %s278
          %s280 = sshll.u32 %s269, 4
          %s281 = int_to_ptr.vmem [resolvable:$true] %s280
          %283 = dma.hbm_to_vmem [thread:$0]  %s279, 256, %s281, %s266
        $region28: #{tpu_custom_call.1} parent=15 // pred_fallthru
          _
        // Predicated region
        $region29: #{tpu_custom_call.1} parent=15 // pred_check
          %p284 = pneg %p141
        $region30: #{tpu_custom_call.1} parent=15 // pred_check_branch
          %286 = sbr.rel (%p284) target = $region32
        $region31: #{tpu_custom_call.1} parent=15 // pred_region
          %s287 = sand.u32 %s131, 1
          %s288 = scalar_lea.sflag [#allocation9], %s287
          %s289 = sand.u32 %s131, 1
          %s290 = smul.addr %s289, 16
          %s291 = scalar_lea.vmem [#allocation8], %s290
          %s292 = smul.u32 2, %s31
          %294 = vsyncadd %s288, 0
          %s295 = smul.addr %s30, 2
          %s296 = sadd.s32 %s292, %s295
          %s297 = smul.addr %s296, 8
          %s298 = scalar_lea.hbm %s3, %s297
          %s300 = sshll.u32 %s298, 4
          %s301 = int_to_ptr.hbm [resolvable:$true] %s300
          %s302 = sshll.u32 %s291, 4
          %s303 = int_to_ptr.vmem [resolvable:$true] %s302
          %305 = dma.hbm_to_vmem [thread:$0]  %s301, 256, %s303, %s288
        $region32: #{tpu_custom_call.1} parent=15 // pred_fallthru
          _
        // Predicated region
        $region33: #{tpu_custom_call.1} parent=15 // pred_check
          %p306 = pneg %p167
        $region34: #{tpu_custom_call.1} parent=15 // pred_check_branch
          %308 = sbr.rel (%p306) target = $region36
        $region35: #{tpu_custom_call.1} parent=15 // pred_region
          %p309 = scmp.lt.s32.totalorder %s30, 1
          %s310 = scalar_select %p309, %s30, 1
          %s311 = smul.addr %s310, 8
          %s312 = scalar_lea.vmem %s4, %s311
        $region36: #{tpu_custom_call.1} parent=15 // pred_fallthru
          _
      $region16: #{tpu_custom_call.1} parent=5 // pred_fallthru
        _
      %p313 = scmp.le.s32.totalorder 1, %s23
      %p314 = scmp.lt.s32.totalorder %s23, 3
      %p315 = pnand %p313, %p314
      %p316 = pneg %p315
      // Predicated region
      $region37: #{tpu_custom_call.1} parent=5 // pred_check
        _
      $region38: #{tpu_custom_call.1} parent=5 // pred_check_branch
        %318 = sbr.rel (%p315) target = $region40
      $region39: #{tpu_custom_call.1} parent=5 // pred_region
        %s319 = ssub.s32 %s23, 1
        %s320 = sand.u32 %s50, 1
        %s321 = scalar_lea.sflag [#allocation3], %s320
        %s322 = sand.u32 %s50, 1
        %s323 = smul.addr %s322, 16
        %s324 = scalar_lea.vmem [#allocation2], %s323
        // Predicated region
        $region41: #{tpu_custom_call.1} parent=39 // pred_check
          %p325 = pneg %p63
        $region42: #{tpu_custom_call.1} parent=39 // pred_check_branch
          %327 = sbr.rel (%p325) target = $region44
        $region43: #{tpu_custom_call.1} parent=39 // pred_region
          %329 = dma.done %s321, 256
        $region44: #{tpu_custom_call.1} parent=39 // pred_fallthru
          _
        %s330 = sand.u32 %s28, 1
        %s331 = scalar_lea.sflag [#allocation6], %s330
        %s332 = sand.u32 %s78, 1
        %s333 = smul.addr %s332, 16
        %s334 = scalar_lea.vmem [#allocation5], %s333
        // Predicated region
        $region45: #{tpu_custom_call.1} parent=39 // pred_check
          %p335 = pneg %p91
        $region46: #{tpu_custom_call.1} parent=39 // pred_check_branch
          %337 = sbr.rel (%p335) target = $region48
        $region47: #{tpu_custom_call.1} parent=39 // pred_region
          %339 = dma.done %s331, 256
        $region48: #{tpu_custom_call.1} parent=39 // pred_fallthru
          _
        %s340 = sand.u32 %s28, 1
        %s341 = scalar_lea.sflag [#allocation6], %s340
        %s342 = sand.u32 %s106, 1
        %s343 = smul.addr %s342, 16
        %s344 = scalar_lea.vmem [#allocation7], %s343
        // Predicated region
        $region49: #{tpu_custom_call.1} parent=39 // pred_check
          %p345 = pneg %p119
        $region50: #{tpu_custom_call.1} parent=39 // pred_check_branch
          %347 = sbr.rel (%p345) target = $region52
        $region51: #{tpu_custom_call.1} parent=39 // pred_region
          %349 = dma.done %s341, 256
        $region52: #{tpu_custom_call.1} parent=39 // pred_fallthru
          _
        %s350 = sand.u32 %s134, 1
        %s351 = scalar_lea.sflag [#allocation9], %s350
        %s352 = sand.u32 %s134, 1
        %s353 = smul.addr %s352, 16
        %s354 = scalar_lea.vmem [#allocation8], %s353
        // Predicated region
        $region53: #{tpu_custom_call.1} parent=39 // pred_check
          %p355 = pneg %p147
        $region54: #{tpu_custom_call.1} parent=39 // pred_check_branch
          %357 = sbr.rel (%p355) target = $region56
        $region55: #{tpu_custom_call.1} parent=39 // pred_region
          %359 = dma.done %s351, 256
        $region56: #{tpu_custom_call.1} parent=39 // pred_fallthru
          _
        %s360 = sand.u32 %s50, 1
        %s361 = scalar_lea.sflag [#allocation3], %s360
        %s362 = sand.u32 %s50, 1
        %s363 = smul.addr %s362, 16
        %s364 = scalar_lea.vmem [#allocation2], %s363
        %p365 = pneg %p63
        %p366 = pneg %p60
        %s367 = sand.u32 %s28, 1
        %s368 = scalar_lea.sflag [#allocation6], %s367
        %s369 = sand.u32 %s78, 1
        %s370 = smul.addr %s369, 16
        %s371 = scalar_lea.vmem [#allocation5], %s370
        %p372 = pneg %p91
        %p373 = pneg %p88
        %s374 = sand.u32 %s28, 1
        %s375 = scalar_lea.sflag [#allocation6], %s374
        %s376 = sand.u32 %s106, 1
        %s377 = smul.addr %s376, 16
        %s378 = scalar_lea.vmem [#allocation7], %s377
        %p379 = pneg %p119
        %p380 = pneg %p116
        %s381 = sand.u32 %s134, 1
        %s382 = scalar_lea.sflag [#allocation9], %s381
        %s383 = sand.u32 %s134, 1
        %s384 = smul.addr %s383, 16
        %s385 = scalar_lea.vmem [#allocation8], %s384
        %p386 = pneg %p147
        %p387 = pneg %p144
        %p388 = scmp.lt.s32.totalorder %s32, 1
        %s389 = scalar_select %p388, %s32, 1
        %s390 = smul.addr %s389, 8
        %s391 = scalar_lea.vmem %s4, %s390
        %p392 = pneg %p173
        %p393 = pneg %p170
        %p394 = pneg %p199
        %p395 = pneg %p196
        %s396 = sand.u32 %s186, 1
        %s397 = scalar_lea.sflag [#allocation4], %s396
        %s398 = sand.u32 %s186, 1
        %s399 = smul.addr %s398, 8
        %s400 = scalar_lea.vmem [#allocation10], %s399
        %s401 = smul.u32 2, %s33
        %s402 = smul.u32 2, %s33
        %s403 = smul.u32 2, %s33
        %s404 = smul.u32 2, %s33
        %p405 = scmp.lt.s32.totalorder %s32, 1
        %s406 = scalar_select %p405, %s32, 1
        %s407 = smul.addr %s406, 8
        %s408 = scalar_lea.vmem %s4, %s407
        %p409 = scmp.eq.s32.totalorder %s33, 0
        // Predicated region
        $region57: #{tpu_custom_call.1} parent=39 // pred_check
          %p410 = pneg %p409
        $region58: #{tpu_custom_call.1} parent=39 // pred_check_branch
          %412 = sbr.rel (%p410) target = $region60
        $region59: #{tpu_custom_call.1} parent=39 // pred_region
          %413 = vst [vmem:[%s400] sm:$0xff] 0.0
        $region60: #{tpu_custom_call.1} parent=39 // pred_fallthru
          _
        %v414 = vld [vmem:[%s324] sm:$0xff]
        %v415 = vld [vmem:[%s324 + $0x8] sm:$0xff]
        %v416 = vld [vmem:[%s344] sm:$0xff]
        %v417 = vld [vmem:[%s344 + $0x8] sm:$0xff]
        %v418 = vadd.f32 %v416, 1e-10
        %v419 = vadd.f32 %v417, 1e-10
        %v420 = vadd.f32 %v418, 1.0
        %v421 = vadd.f32 %v419, 1.0
        %v422 = vadd.f32 %v418, 2.0
        %v423 = vadd.f32 %v419, 2.0
        %v424 = vadd.f32 %v418, 3.0
        %v425 = vadd.f32 %v419, 3.0
        %v426 = vmul.f32 %v418, %v420
        %v427 = vmul.f32 %v419, %v421
        %v428 = vmul.f32 %v426, %v422
        %v429 = vmul.f32 %v427, %v423
        %v430 = vmul.f32 %v428, %v424
        %v431 = vmul.f32 %v429, %v425
        %v432 = vadd.f32 %v418, 4.0
        %v433 = vadd.f32 %v419, 4.0
        %v434 = vlog2.pop %v432
        %v435 = vmul.f32 %v434, 0.6931472
        %v436 = vlog2.pop %v433
        %v437 = vmul.f32 %v436, 0.6931472
        %v438 = vrcp.pop %v432
        %v439 = vrcp.pop %v433
        %v440 = vmul.f32 %v438, %v438
        %v441 = vmul.f32 %v439, %v439
        %v442 = vmul.f32 %v440, 0.0027777778
        %v443 = vmul.f32 %v441, 0.0027777778
        %v444 = vsub.f32 0.083333336, %v442
        %v445 = vsub.f32 0.083333336, %v443
        %v446 = vmul.f32 %v438, %v444
        %v447 = vmul.f32 %v439, %v445
        %v448 = vsub.f32 %v432, 0.5
        %v449 = vsub.f32 %v433, 0.5
        %v450 = vmul.f32 %v448, %v435
        %v451 = vmul.f32 %v449, %v437
        %v452 = vsub.f32 %v450, %v432
        %v453 = vsub.f32 %v451, %v433
        %v454 = vadd.f32 %v446, 0.9189385
        %v455 = vadd.f32 %v447, 0.9189385
        %v456 = vadd.f32 %v452, %v454
        %v457 = vadd.f32 %v453, %v455
        %v458 = vlog2.pop %v430
        %v459 = vmul.f32 %v458, 0.6931472
        %v460 = vlog2.pop %v431
        %v461 = vmul.f32 %v460, 0.6931472
        %v462 = vsub.f32 %v456, %v459
        %v463 = vsub.f32 %v457, %v461
        %v464 = vadd.f32 %v414, 1.0
        %v465 = vadd.f32 %v415, 1.0
        %v466 = vadd.f32 %v464, 1.0
        %v467 = vadd.f32 %v465, 1.0
        %v468 = vadd.f32 %v464, 2.0
        %v469 = vadd.f32 %v465, 2.0
        %v470 = vadd.f32 %v464, 3.0
        %v471 = vadd.f32 %v465, 3.0
        %v472 = vmul.f32 %v464, %v466
        %v473 = vmul.f32 %v465, %v467
        %v474 = vmul.f32 %v472, %v468
        %v475 = vmul.f32 %v473, %v469
        %v476 = vmul.f32 %v474, %v470
        %v477 = vmul.f32 %v475, %v471
        %v478 = vadd.f32 %v464, 4.0
        %v479 = vadd.f32 %v465, 4.0
        %v480 = vlog2.pop %v478
        %v481 = vmul.f32 %v480, 0.6931472
        %v482 = vlog2.pop %v479
        %v483 = vmul.f32 %v482, 0.6931472
        %v484 = vrcp.pop %v478
        %v485 = vrcp.pop %v479
        %v486 = vmul.f32 %v484, %v484
        %v487 = vmul.f32 %v485, %v485
        %v488 = vmul.f32 %v486, 0.0027777778
        %v489 = vmul.f32 %v487, 0.0027777778
        %v490 = vsub.f32 0.083333336, %v488
        %v491 = vsub.f32 0.083333336, %v489
        %v492 = vmul.f32 %v484, %v490
        %v493 = vmul.f32 %v485, %v491
        %v494 = vsub.f32 %v478, 0.5
        %v495 = vsub.f32 %v479, 0.5
        %v496 = vmul.f32 %v494, %v481
        %v497 = vmul.f32 %v495, %v483
        %v498 = vsub.f32 %v496, %v478
        %v499 = vsub.f32 %v497, %v479
        %v500 = vadd.f32 %v492, 0.9189385
        %v501 = vadd.f32 %v493, 0.9189385
        %v502 = vadd.f32 %v498, %v500
        %v503 = vadd.f32 %v499, %v501
        %v504 = vlog2.pop %v476
        %v505 = vmul.f32 %v504, 0.6931472
        %v506 = vlog2.pop %v477
        %v507 = vmul.f32 %v506, 0.6931472
        %v508 = vsub.f32 %v502, %v505
        %v509 = vsub.f32 %v503, %v507
        %v510 = vadd.f32 %v462, %v508
        %v511 = vadd.f32 %v463, %v509
        %v512 = vadd.f32 %v414, %v418
        %v513 = vadd.f32 %v415, %v419
        %v514 = vadd.f32 %v512, 1.0
        %v515 = vadd.f32 %v513, 1.0
        %v516 = vadd.f32 %v512, 2.0
        %v517 = vadd.f32 %v513, 2.0
        %v518 = vadd.f32 %v512, 3.0
        %v519 = vadd.f32 %v513, 3.0
        %v520 = vmul.f32 %v512, %v514
        %v521 = vmul.f32 %v513, %v515
        %v522 = vmul.f32 %v520, %v516
        %v523 = vmul.f32 %v521, %v517
        %v524 = vmul.f32 %v522, %v518
        %v525 = vmul.f32 %v523, %v519
        %v526 = vadd.f32 %v512, 4.0
        %v527 = vadd.f32 %v513, 4.0
        %v528 = vlog2.pop %v526
        %v529 = vmul.f32 %v528, 0.6931472
        %v530 = vlog2.pop %v527
        %v531 = vmul.f32 %v530, 0.6931472
        %v532 = vrcp.pop %v526
        %v533 = vrcp.pop %v527
        %v534 = vmul.f32 %v532, %v532
        %v535 = vmul.f32 %v533, %v533
        %v536 = vmul.f32 %v534, 0.0027777778
        %v537 = vmul.f32 %v535, 0.0027777778
        %v538 = vsub.f32 0.083333336, %v536
        %v539 = vsub.f32 0.083333336, %v537
        %v540 = vmul.f32 %v532, %v538
        %v541 = vmul.f32 %v533, %v539
        %v542 = vsub.f32 %v526, 0.5
        %v543 = vsub.f32 %v527, 0.5
        %v544 = vmul.f32 %v542, %v529
        %v545 = vmul.f32 %v543, %v531
        %v546 = vsub.f32 %v544, %v526
        %v547 = vsub.f32 %v545, %v527
        %v548 = vadd.f32 %v540, 0.9189385
        %v549 = vadd.f32 %v541, 0.9189385
        %v550 = vadd.f32 %v546, %v548
        %v551 = vadd.f32 %v547, %v549
        %v552 = vlog2.pop %v524
        %v553 = vmul.f32 %v552, 0.6931472
        %v554 = vlog2.pop %v525
        %v555 = vmul.f32 %v554, 0.6931472
        %v556 = vsub.f32 %v550, %v553
        %v557 = vsub.f32 %v551, %v555
        %v558 = vsub.f32 %v510, %v556
        %v559 = vsub.f32 %v511, %v557
        %v560 = vld [vmem:[%s334] sm:$0xff]
        %v561 = vld [vmem:[%s334 + $0x8] sm:$0xff]
        %v562 = vld [vmem:[%s408] sm:$0xff]
        %564 = vset.pattern.permute.xlu0 0
        %565 = vperm.xlu0 %564, %v562
        %v566 = vpop.permute.xlu0 %565
        %v568 = vmul.f32 %v560, %v566
        %v569 = vmul.f32 %v561, %v566
        %v570 = vld [vmem:[%s354] sm:$0xff]
        %v571 = vld [vmem:[%s354 + $0x8] sm:$0xff]
        %v572 = vlog2.pop %v418
        %v573 = vmul.f32 %v572, 0.6931472
        %v574 = vlog2.pop %v419
        %v575 = vmul.f32 %v574, 0.6931472
        %v576 = vadd.f32 %v568, 1e-10
        %v577 = vadd.f32 %v569, 1e-10
        %v578 = vlog2.pop %v576
        %v579 = vmul.f32 %v578, 0.6931472
        %v580 = vlog2.pop %v577
        %v581 = vmul.f32 %v580, 0.6931472
        %v582 = vadd.f32 %v416, %v568
        %v583 = vadd.f32 %v417, %v569
        %v584 = vadd.f32 %v582, 1e-10
        %v585 = vadd.f32 %v583, 1e-10
        %v586 = vlog2.pop %v584
        %v587 = vmul.f32 %v586, 0.6931472
        %v588 = vlog2.pop %v585
        %v589 = vmul.f32 %v588, 0.6931472
        %v590 = vsub.f32 %v587, %v573
        %v591 = vsub.f32 %v589, %v575
        %v592 = vadd.f32 %v416, %v414
        %v593 = vadd.f32 %v417, %v415
        %v594 = vmul.f32 %v592, %v590
        %v595 = vmul.f32 %v593, %v591
        %v596 = vsub.f32 %v573, %v579
        %v597 = vsub.f32 %v575, %v581
        %v598 = vmul.f32 %v414, %v596
        %v599 = vmul.f32 %v415, %v597
        %v600 = vadd.f32 %v594, %v598
        %v601 = vadd.f32 %v595, %v599
        %v602 = vsub.f32 1.0, %v570
        %v603 = vsub.f32 1.0, %v571
        %v604 = vadd.f32 %v558, %v600
        %v605 = vadd.f32 %v559, %v601
        %v606 = vadd.f32 %v602, 1e-10
        %v607 = vadd.f32 %v603, 1e-10
        %v608 = vlog2.pop %v606
        %v609 = vmul.f32 %v608, 0.6931472
        %v610 = vlog2.pop %v607
        %v611 = vmul.f32 %v610, 0.6931472
        %v612 = vsub.f32 %v604, %v609
        %v613 = vsub.f32 %v605, %v611
        %v614 = vmul.f32 %v416, %v590
        %v615 = vmul.f32 %v417, %v591
        %v616 = vsub.f32 0.0, %v614
        %v617 = vsub.f32 0.0, %v615
        %v618 = vmul.f32 %v616, 1.442695
        %v619 = vpow.pop %v618
        %v620 = vmul.f32 %v617, 1.442695
        %v621 = vpow.pop %v620
        %v622 = vmul.f32 %v602, %v619
        %v623 = vmul.f32 %v603, %v621
        %v624 = vadd.f32 %v570, %v622
        %v625 = vadd.f32 %v571, %v623
        %v626 = vadd.f32 %v624, 1e-10
        %v627 = vadd.f32 %v625, 1e-10
        %v628 = vlog2.pop %v626
        %v629 = vmul.f32 %v628, 0.6931472
        %v630 = vlog2.pop %v627
        %v631 = vmul.f32 %v630, 0.6931472
        %v632 = vsub.f32 0.0, %v629
        %v633 = vsub.f32 0.0, %v631
        %vm634 = vcmp.le.f32.partialorder %v414, 1e-08
        %vm635 = vcmp.le.f32.partialorder %v415, 1e-08
        %v636 = vsel %vm634, %v632, %v612
        %v637 = vsel %vm635, %v633, %v613
        %v638 = vmul.f32 %v570, %v570
        %v639 = vmul.f32 %v571, %v571
        %v640 = vmul.f32 %v638, 0.1
        %v641 = vmul.f32 %v639, 0.1
        %v642 = vadd.f32 %v636, %v640
        %v643 = vadd.f32 %v637, %v641
        %v644 = vadd.f32 %v642, %v643
        %v645 = vld [vmem:[%s400] sm:$0xff]
        %v646 = vadd.f32 %v645, %v644
        %647 = vst [vmem:[%s400] sm:$0xff] %v646
        %s648 = sand.u32 %s186, 1
        %s649 = scalar_lea.sflag [#allocation4], %s648
        %s650 = sand.u32 %s186, 1
        %s651 = smul.addr %s650, 8
        %s652 = scalar_lea.vmem [#allocation10], %s651
        // Predicated region
        $region61: #{tpu_custom_call.1} parent=39 // pred_check
          %p653 = pneg %p196
        $region62: #{tpu_custom_call.1} parent=39 // pred_check_branch
          %655 = sbr.rel (%p653) target = $region64
        $region63: #{tpu_custom_call.1} parent=39 // pred_region
          %657 = vsyncadd %s649, 0
          %s658 = smul.addr %s32, 8
          %s659 = scalar_lea.hbm %s5, %s658
          %s661 = sshll.u32 %s652, 4
          %s662 = int_to_ptr.vmem [resolvable:$true] %s661
          %s663 = sshll.u32 %s659, 4
          %s664 = int_to_ptr.hbm [resolvable:$true] %s663
          %666 = dma.vmem_to_hbm [thread:$0]  %s662, 128, %s664, %s649
        $region64: #{tpu_custom_call.1} parent=39 // pred_fallthru
          _
      $region40: #{tpu_custom_call.1} parent=5 // pred_fallthru
        _
      %p667 = scmp.le.s32.totalorder 2, %s23
      // Predicated region
      $region65: #{tpu_custom_call.1} parent=5 // pred_check
        %p668 = pneg %p667
      $region66: #{tpu_custom_call.1} parent=5 // pred_check_branch
        %670 = sbr.rel (%p668) target = $region68
      $region67: #{tpu_custom_call.1} parent=5 // pred_region
        %s671 = ssub.s32 %s23, 2
        // Predicated region
        $region69: #{tpu_custom_call.1} parent=67 // pred_check
          %p672 = pneg %p202
        $region70: #{tpu_custom_call.1} parent=67 // pred_check_branch
          %674 = sbr.rel (%p672) target = $region72
        $region71: #{tpu_custom_call.1} parent=67 // pred_region
          %s675 = sand.u32 %s187, 1
          %s676 = scalar_lea.sflag [#allocation4], %s675
          %s677 = sand.u32 %s187, 1
          %s678 = smul.addr %s677, 8
          %s679 = scalar_lea.vmem [#allocation10], %s678
          %681 = dma.done %s676, 128
        $region72: #{tpu_custom_call.1} parent=67 // pred_fallthru
          _
      $region68: #{tpu_custom_call.1} parent=5 // pred_fallthru
        _
    $region6: #{tpu_custom_call.1} parent=1 // loop_footer
      %s27 = sadd.s32 1, %s23
    $region7: #{tpu_custom_call.1} parent=1 // loop_footer_branch
      %22 = sbr.rel target = $region3
    $region8: #{tpu_custom_call.1} parent=1 // loop_exit
      _
    %682 = vsyncpa [#allocation3], 1
    %s683 = scalar_lea.sflag [#allocation3], 1
    %684 = vsyncpa %s683, 1
    %685 = vsyncpa [#allocation6], 1
    %s686 = scalar_lea.sflag [#allocation6], 1
    %687 = vsyncpa %s686, 1
    %688 = vsyncpa [#allocation9], 1
    %s689 = scalar_lea.sflag [#allocation9], 1
    %690 = vsyncpa %s689, 1
    %691 = vsyncpa [#allocation4], 1
    %s692 = scalar_lea.sflag [#allocation4], 1
    %693 = vsyncpa %s692, 1

</llo_original>
